<compile_context>
chip_gen: v7x
topology: tpu7x:2x2x1
jax: 0.10.0
libtpu: 0.0.40
codegen_flags: <defaults>
</compile_context>

<pallas_src>
import jax
import jax.numpy as jnp
from jax.experimental import pallas as pl
from jax.experimental.pallas import tpu as pltpu


def _channel_attention_kernel(x_ref, w_ref, b_ref, o_ref):
    """Fused: gate = sigmoid(mean_hw(x) @ W.T + b); out = x * gate.

    Block shapes: x_ref/o_ref (TB, C, HW), w_ref (C, C) [= W.T / HW],
    b_ref (1, C).
    """
    x = x_ref[...]                                              # (TB, C, HW)
    # Pool first (accumulate in f32 even for bf16 inputs); 1/HW is already
    # folded into w_ref, so the raw sums feed the matvec directly.
    pooled = jnp.sum(x, axis=-1, dtype=jnp.float32)             # (TB, C)
    logits = jnp.dot(pooled, w_ref[...],
                     preferred_element_type=jnp.float32) + b_ref[...]  # (TB, C)
    gate = jax.nn.sigmoid(logits).astype(x.dtype)               # (TB, C)
    # Broadcast multiply in the input dtype (native bf16 VPU on v6e/v7x).
    o_ref[...] = x * gate[:, :, None]


def channel_attention(x, fc_w, fc_b):
    """x: (N, C, H, W) NCHW (PyTorch layout), fc_w: (C, C, 1, 1), fc_b: (C,)."""
    N, C, H, W = x.shape
    HW = H * W
    xr = x.reshape(N, C, HW)                                # free view, no transpose
    inv_hw = 1.0 / HW
    # (Cin, Cout) with the mean folded in: logits = sum_hw(x) @ (W.T / HW) + b.
    wt = (fc_w[:, :, 0, 0].T * inv_hw).astype(jnp.float32)  # (C, C)
    bm = fc_b.reshape(1, C).astype(jnp.float32)             # (1, C)

    itemsize = jnp.dtype(x.dtype).itemsize
    per_sample_bytes = C * HW * itemsize
    # Batch samples per grid step: target ~2 MiB per block so the per-step
    # pipeline overhead is amortized while double-buffered in+out still fits
    # the default scoped VMEM on every chip (v5e 16 MiB ... v7x 32 MiB).
    tb = int(max(1, min(N, (2 * 1024 * 1024) // max(per_sample_bytes, 1))))
    grid = (pl.cdiv(N, tb),)

    block_bytes = tb * per_sample_bytes
    # Double-buffered input + output blocks, small weight/bias, plus headroom.
    vmem_needed = 4 * block_bytes + 4 * (C * C + C) * 4 + (2 << 20)
    vmem_limit = int(min(max(vmem_needed, 32 * 1024 * 1024), 64 * 1024 * 1024))

    cost = pl.CostEstimate(
        flops=N * (2 * C * HW + 2 * C * C),        # pool + gate-mul + matvec
        transcendentals=N * C,                      # sigmoid exp
        bytes_accessed=2 * N * per_sample_bytes + wt.size * 4 + bm.size * 4,
    )

    out = pl.pallas_call(
        _channel_attention_kernel,
        out_shape=jax.ShapeDtypeStruct((N, C, HW), x.dtype),
        grid=grid,
        in_specs=[
            # Trailing block dims cover the full (C, HW) extents, so there is
            # no (8,128) divisibility constraint and no padding materializes.
            pl.BlockSpec((tb, C, HW), lambda n: (n, 0, 0)),
            pl.BlockSpec((C, C), lambda n: (0, 0)),
            pl.BlockSpec((1, C), lambda n: (0, 0)),
        ],
        out_specs=pl.BlockSpec((tb, C, HW), lambda n: (n, 0, 0)),
        compiler_params=pltpu.CompilerParams(
            dimension_semantics=("parallel",),
            vmem_limit_bytes=vmem_limit),
        cost_estimate=cost,
    )(xr, wt, bm)
    return out.reshape(N, C, H, W)


if __name__ == "__main__":
    N, C, H, W = 2, 32, 16, 16                    # HW = 256 -> lane-dense stores

    key = jax.random.PRNGKey(0)
    kx, kw, kb = jax.random.split(key, 3)
    x = jax.random.normal(kx, (N, C, H, W), jnp.float32)
    fc_w = 0.1 * jax.random.normal(kw, (C, C, 1, 1), jnp.float32)
    fc_b = 0.05 * jax.random.normal(kb, (C,), jnp.float32)

    out = jax.jit(channel_attention)(x, fc_w, fc_b)
    jax.block_until_ready(out)

    # Pure-JAX reference: x * sigmoid(fc(adaptive_avg_pool(x))).
    pooled = jnp.mean(x, axis=(2, 3))                              # (N, C)
    logits = pooled @ fc_w[:, :, 0, 0].T + fc_b                    # (N, C)
    ref = x * jax.nn.sigmoid(logits)[:, :, None, None]

    assert out.shape == x.shape, out.shape
    assert jnp.allclose(out, ref, atol=1e-4, rtol=1e-4), float(
        jnp.max(jnp.abs(out - ref)))
    print("KERNEL_OK")
</pallas_src>

<mosaic_0001>
module attributes {stable_mosaic.version = 11 : i64} {
  func.func @_channel_attention_kernel(%arg0: i32, %arg1: memref<2x32x256xf32, #tpu.memory_space<vmem>>, %arg2: memref<32x32xf32, #tpu.memory_space<vmem>>, %arg3: memref<1x32xf32, #tpu.memory_space<vmem>>, %arg4: memref<2x32x256xf32, #tpu.memory_space<vmem>>) attributes {dimension_semantics = [#tpu.dimension_semantics<parallel>], iteration_bounds = array<i64: 1>, scalar_prefetch = 0 : i64, scratch_operands = 0 : i64, tpu.core_type = #tpu.core_type<tc>, window_params = [{transform_indices = @transform_0, window_bounds = array<i64: 2, 32, 256>}, {pipeline_mode = #tpu.pipeline_mode<synchronous>, transform_indices = @transform_1, window_bounds = array<i64: 32, 32>}, {pipeline_mode = #tpu.pipeline_mode<synchronous>, transform_indices = @transform_2, window_bounds = array<i64: 1, 32>}, {transform_indices = @transform_3, window_bounds = array<i64: 2, 32, 256>}]} {
    %c0 = arith.constant 0 : index
    %c0_0 = arith.constant 0 : index
    %c0_1 = arith.constant 0 : index
    %0 = vector.load %arg1[%c0, %c0_0, %c0_1] : memref<2x32x256xf32, #tpu.memory_space<vmem>>, vector<2x32x256xf32>
    %cst = arith.constant dense<0.000000e+00> : vector<2x32xf32>
    %1 = vector.multi_reduction <add>, %0, %cst [2] : vector<2x32x256xf32> to vector<2x32xf32>
    %c0_2 = arith.constant 0 : index
    %c0_3 = arith.constant 0 : index
    %2 = vector.load %arg2[%c0_2, %c0_3] : memref<32x32xf32, #tpu.memory_space<vmem>>, vector<32x32xf32>
    %cst_4 = arith.constant dense<0.000000e+00> : vector<2x32xf32>
    %3 = tpu.matmul %1, %2, %cst_4 {dimension_numbers = #tpu.dot_dimension_numbers<[1], [0], [0], [1], [0, 0, 1, 1], [], []>} : vector<2x32xf32>, vector<32x32xf32>, vector<2x32xf32> -> vector<2x32xf32>
    %c0_5 = arith.constant 0 : index
    %c0_6 = arith.constant 0 : index
    %4 = vector.load %arg3[%c0_5, %c0_6] : memref<1x32xf32, #tpu.memory_space<vmem>>, vector<1x32xf32>
    %5 = vector.broadcast %4 : vector<1x32xf32> to vector<2x32xf32>
    %6 = arith.addf %3, %5 : vector<2x32xf32>
    %7 = arith.negf %6 : vector<2x32xf32>
    %8 = math.exp %7 : vector<2x32xf32>
    %cst_7 = arith.constant 1.000000e+00 : f32
    %9 = vector.broadcast %cst_7 : f32 to vector<2x32xf32>
    %10 = arith.addf %9, %8 : vector<2x32xf32>
    %11 = arith.divf %9, %10 : vector<2x32xf32>
    %12 = vector.shape_cast %11 : vector<2x32xf32> to vector<2x32x1xf32>
    %13 = vector.broadcast %12 : vector<2x32x1xf32> to vector<2x32x256xf32>
    %14 = arith.mulf %0, %13 : vector<2x32x256xf32>
    %c0_8 = arith.constant 0 : index
    %c0_9 = arith.constant 0 : index
    %c0_10 = arith.constant 0 : index
    %15 = vector.load %arg4[%c0_8, %c0_9, %c0_10] : memref<2x32x256xf32, #tpu.memory_space<vmem>>, vector<2x32x256xf32>
    tpu.vector_store %arg4[%c0_8, %c0_9, %c0_10], %14 {strides = array<i32>} : memref<2x32x256xf32, #tpu.memory_space<vmem>>, vector<2x32x256xf32>,
    return
  }
  func.func @transform_0(%arg0: i32) -> (i32, i32, i32) {
    %c0_i32 = arith.constant 0 : i32
    %c0_i32_0 = arith.constant 0 : i32
    %c0_i32_1 = arith.constant 0 : i32
    return %arg0, %c0_i32, %c0_i32_0 : i32, i32, i32
  }
  func.func @transform_1(%arg0: i32) -> (i32, i32) {
    %c0_i32 = arith.constant 0 : i32
    %c0_i32_0 = arith.constant 0 : i32
    %c0_i32_1 = arith.constant 0 : i32
    return %c0_i32, %c0_i32_0 : i32, i32
  }
  func.func @transform_2(%arg0: i32) -> (i32, i32) {
    %c0_i32 = arith.constant 0 : i32
    %c0_i32_0 = arith.constant 0 : i32
    %c0_i32_1 = arith.constant 0 : i32
    return %c0_i32, %c0_i32_0 : i32, i32
  }
  func.func @transform_3(%arg0: i32) -> (i32, i32, i32) {
    %c0_i32 = arith.constant 0 : i32
    %c0_i32_0 = arith.constant 0 : i32
    %c0_i32_1 = arith.constant 0 : i32
    return %arg0, %c0_i32, %c0_i32_0 : i32, i32, i32
  }
}

</mosaic_0001>

<llo_original>
// kernel: channel_attention.1
$region0: #{channel_attention.1}
  #allocation0 [shape = 'u32[]', space=smem, size = 0x4, offset = 0x4, fixed_abs, tag = 'smem constant byte address 0x4 - core index']
  #allocation1 [shape = 'u32[144,128]{1,0:T(1,128)}', space=vmem, size = 0x12000, scoped, tag = 'internal scratch']
  %s0 = inlined_call_operand.vmem [shape: f32[2,32,256], index: 0, kind: input, shape index: {}]
  %s1 = inlined_call_operand.vmem [shape: f32[32,32], index: 1, kind: input, shape index: {}]
  %s2 = inlined_call_operand.vmem [shape: f32[1,32], index: 2, kind: input, shape index: {}]
  %s3 = inlined_call_operand.vmem [shape: f32[2,32,256], index: 3, kind: output, shape index: {}]
  %s4 = sld [smem:[#allocation0]]
  $region22: #{channel_attention.1} parent=0
    _
  %s6 = ssub.s32 1, %s4
  %s7 = scalar_select 0, %s6, %s4
  // Predicated region
  $region2: #{channel_attention.1} parent=0 // pred_check
    _
  $region3: #{channel_attention.1} parent=0 // pred_check_branch
    %9 = sbr.rel (0) target = $region5
  $region4: #{channel_attention.1} parent=0 // pred_region
    _
  $region5: #{channel_attention.1} parent=0 // pred_fallthru
    _
  // Predicated region
  $region6: #{channel_attention.1} parent=0 // pred_check
    _
  $region7: #{channel_attention.1} parent=0 // pred_check_branch
    %11 = sbr.rel (0) target = $region9
  $region8: #{channel_attention.1} parent=0 // pred_region
    _
  $region9: #{channel_attention.1} parent=0 // pred_fallthru
    _
  // Predicated region
  $region10: #{channel_attention.1} parent=0 // pred_check
    _
  $region11: #{channel_attention.1} parent=0 // pred_check_branch
    %13 = sbr.rel (0) target = $region13
  $region12: #{channel_attention.1} parent=0 // pred_region
    _
  $region13: #{channel_attention.1} parent=0 // pred_fallthru
    _
  %v14 = vld [vmem:[%s0] sm:$0xff]
  %v15 = vld [vmem:[%s0 + $0x8] sm:$0xff]
  %v16 = vld [vmem:[%s0 + $0x10] sm:$0xff]
  %v17 = vld [vmem:[%s0 + $0x18] sm:$0xff]
  %v18 = vld [vmem:[%s0 + $0x20] sm:$0xff]
  %v19 = vld [vmem:[%s0 + $0x28] sm:$0xff]
  %v20 = vld [vmem:[%s0 + $0x30] sm:$0xff]
  %v21 = vld [vmem:[%s0 + $0x38] sm:$0xff]
  %v22 = vld [vmem:[%s0 + $0x40] sm:$0xff]
  %v23 = vld [vmem:[%s0 + $0x48] sm:$0xff]
  %v24 = vld [vmem:[%s0 + $0x50] sm:$0xff]
  %v25 = vld [vmem:[%s0 + $0x58] sm:$0xff]
  %v26 = vld [vmem:[%s0 + $0x60] sm:$0xff]
  %v27 = vld [vmem:[%s0 + $0x68] sm:$0xff]
  %v28 = vld [vmem:[%s0 + $0x70] sm:$0xff]
  %v29 = vld [vmem:[%s0 + $0x78] sm:$0xff]
  %v30 = vadd.f32 %v14, %v15
  %31 = vadd.xlane.f32.xlu0 %v30
  %v32 = vpop.xlane.xlu0 %31
  %v33 = vadd.f32 %v16, %v17
  %34 = vadd.xlane.f32.xlu0 %v33
  %v35 = vpop.xlane.xlu0 %34
  %v36 = vadd.f32 %v18, %v19
  %37 = vadd.xlane.f32.xlu0 %v36
  %v38 = vpop.xlane.xlu0 %37
  %v39 = vadd.f32 %v20, %v21
  %40 = vadd.xlane.f32.xlu0 %v39
  %v41 = vpop.xlane.xlu0 %40
  %v42 = vadd.f32 %v22, %v23
  %43 = vadd.xlane.f32.xlu0 %v42
  %v44 = vpop.xlane.xlu0 %43
  %v45 = vadd.f32 %v24, %v25
  %46 = vadd.xlane.f32.xlu0 %v45
  %v47 = vpop.xlane.xlu0 %46
  %v48 = vadd.f32 %v26, %v27
  %49 = vadd.xlane.f32.xlu0 %v48
  %v50 = vpop.xlane.xlu0 %49
  %v51 = vadd.f32 %v28, %v29
  %52 = vadd.xlane.f32.xlu0 %v51
  %v53 = vpop.xlane.xlu0 %52
  %v54 = vld [vmem:[%s1] sm:$0xff]
  %v55 = vld [vmem:[%s1 + $0x8] sm:$0xff]
  %v56 = vld [vmem:[%s1 + $0x10] sm:$0xff]
  %v57 = vld [vmem:[%s1 + $0x18] sm:$0xff]
  %v58 = vld [vmem:[%s2] sm:$0x1]
  %v60 = vlaneseq
  %v61 = vshrl.u32 %v60, 7
  %v62 = vsub.s32 0, %v61
  %v63 = vrot.slane %v58, %v62
  %v73 = vlaneseq
  %v74 = vand.u32 %v73, 127
  %v75 = vlaneseq
  %v76 = vshrl.u32 %v75, 7
  %v77 = vsub.s32 %v74, %v76
  %v78 = vrot.slane %v32, %v77
  %v79 = vadd.s32 %v74, 4294967288
  %v80 = vlaneseq
  %v81 = vshrl.u32 %v80, 7
  %v82 = vsub.s32 %v79, %v81
  %v83 = vrot.slane %v35, %v82
  %vm84 = vcmask 130112
  %v85 = vsel %vm84, %v83, %v78
  %v86 = vadd.s32 %v74, 4294967280
  %v87 = vlaneseq
  %v88 = vshrl.u32 %v87, 7
  %v89 = vsub.s32 %v86, %v88
  %v90 = vrot.slane %v38, %v89
  %vm91 = vcmask 195712
  %v92 = vsel %vm91, %v90, %v85
  %v93 = vadd.s32 %v74, 4294967272
  %v94 = vlaneseq
  %v95 = vshrl.u32 %v94, 7
  %v96 = vsub.s32 %v93, %v95
  %v97 = vrot.slane %v41, %v96
  %vm98 = vcmask 261312
  %v99 = vsel %vm98, %v97, %v92
  %v100 = vlaneseq
  %v101 = vshrl.u32 %v100, 7
  %v102 = vsub.s32 %v74, %v101
  %v103 = vrot.slane %v44, %v102
  %v104 = vlaneseq
  %v105 = vshrl.u32 %v104, 7
  %v106 = vsub.s32 %v79, %v105
  %v107 = vrot.slane %v47, %v106
  %v108 = vsel %vm84, %v107, %v103
  %v109 = vlaneseq
  %v110 = vshrl.u32 %v109, 7
  %v111 = vsub.s32 %v86, %v110
  %v112 = vrot.slane %v50, %v111
  %v113 = vsel %vm91, %v112, %v108
  %v114 = vlaneseq
  %v115 = vshrl.u32 %v114, 7
  %v116 = vsub.s32 %v93, %v115
  %v117 = vrot.slane %v53, %v116
  %v118 = vsel %vm98, %v117, %v113
  %vm119 = vcmask 1041409
  %v120 = vsel %vm119, %v118, %v99
  %vm121 = vcmask 261120
  %v122 = vsel %vm121, %v120, 0
  %124 = vmatprep.subr.mxu0 0.0
  %125 = vmatpush1.msra.mxu0 %v54
  %126 = vmatprep.subr.mxu0 0.0
  %127 = vmatpush1.msra.mxu0 %v55
  %128 = vmatprep.subr.mxu0 0.0
  %129 = vmatpush1.msra.mxu0 %v56
  %130 = vmatprep.subr.mxu0 0.0
  %131 = vmatpush1.msra.mxu0 %v57
  %132 = vmatprep.subr.mxu0 0.0
  %133 = vmatpush1.msra.mxu0 0.0
  %134 = vmatprep.subr.mxu0 0.0
  %135 = vmatpush1.msra.mxu0 0.0
  %136 = vmatprep.subr.mxu0 0.0
  %137 = vmatpush1.msra.mxu0 0.0
  %138 = vmatprep.subr.mxu0 0.0
  %139 = vmatpush1.msra.mxu0 0.0
  %140 = vmatprep.subr.mxu0 0.0
  %141 = vmatpush1.msra.mxu0 0.0
  %142 = vmatprep.subr.mxu0 0.0
  %143 = vmatpush1.msra.mxu0 0.0
  %144 = vmatprep.subr.mxu0 0.0
  %145 = vmatpush1.msra.mxu0 0.0
  %146 = vmatprep.subr.mxu0 0.0
  %147 = vmatpush1.msra.mxu0 0.0
  %148 = vmatprep.subr.mxu0 0.0
  %149 = vmatpush1.msra.mxu0 0.0
  %150 = vmatprep.subr.mxu0 0.0
  %151 = vmatpush1.msra.mxu0 0.0
  %152 = vmatprep.subr.mxu0 0.0
  %153 = vmatpush1.msra.mxu0 0.0
  %154 = vmatprep.subr.mxu0 0.0
  %155 = vmatpush1.msra.mxu0 0.0
  %156 = vmatprep.subr.mxu0 0.0
  %157 = vmatpush1.msra.mxu0 0.0
  %158 = vmatprep.subr.mxu0 0.0
  %159 = vmatpush1.msra.mxu0 0.0
  %160 = vmatprep.subr.mxu0 0.0
  %161 = vmatpush1.msra.mxu0 0.0
  %162 = vmatprep.subr.mxu0 0.0
  %163 = vmatpush1.msra.mxu0 0.0
  %164 = vmatprep.subr.mxu0 0.0
  %165 = vmatpush1.msra.mxu0 0.0
  %166 = vmatprep.subr.mxu0 0.0
  %167 = vmatpush1.msra.mxu0 0.0
  %168 = vmatprep.subr.mxu0 0.0
  %169 = vmatpush1.msra.mxu0 0.0
  %170 = vmatprep.subr.mxu0 0.0
  %171 = vmatpush1.msra.mxu0 0.0
  %172 = vmatprep.subr.mxu0 0.0
  %173 = vmatpush1.msra.mxu0 0.0
  %174 = vmatprep.subr.mxu0 0.0
  %175 = vmatpush1.msra.mxu0 0.0
  %176 = vmatprep.subr.mxu0 0.0
  %177 = vmatpush1.msra.mxu0 0.0
  %178 = vmatprep.subr.mxu0 0.0
  %179 = vmatpush1.msra.mxu0 0.0
  %180 = vmatprep.subr.mxu0 0.0
  %181 = vmatpush1.msra.mxu0 0.0
  %182 = vmatprep.subr.mxu0 0.0
  %183 = vmatpush1.msra.mxu0 0.0
  %184 = vmatprep.subr.mxu0 0.0
  %185 = vmatpush1.msra.mxu0 0.0
  %186 = vmatprep.subr.mxu0 0.0
  %187 = vmatpush1.msra.mxu0 0.0
  %188 = vmatprep.mubr.f32.mxu0 0.0
  %189 = vmatmul.mubr.f32.gmra.mrb[0].mxu0 %v122
  %v190 = vpop.f32.mrb[0].mxu0
  %v191 = vadd.f32 %v63, %v190
  %v192 = vpop.f32.mrb[0].mxu0
  %193 = vdwg.mxu0
  %v194 = vxor.u32 %v191, 2147483648
  %v195 = vmul.f32 %v194, 1.442695
  %v196 = vpow.pop %v195
  %v197 = vadd.f32 %v196, 1.0
  %v198 = vrcp.pop %v197
  %v199 = vmul.f32 1.0, %v198
  %v200 = vlaneseq
  %v201 = vshrl.u32 %v200, 7
  %v202 = vsub.s32 0, %v201
  %v203 = vrot.slane %v199, %v202
  %205 = vbcast.lane.b32.xlu0 %v203, 256
  %v206 = vpop.permute.xlu0 %205
  %s208 = sor.u32 256, 8
  %209 = vbcast.lane.b32.xlu0 %v203, %s208
  %v210 = vpop.permute.xlu0 %209
  %s212 = sor.u32 256, 16
  %213 = vbcast.lane.b32.xlu0 %v203, %s212
  %v214 = vpop.permute.xlu0 %213
  %s216 = sor.u32 256, 24
  %217 = vbcast.lane.b32.xlu0 %v203, %s216
  %v218 = vpop.permute.xlu0 %217
  %v219 = vlaneseq
  %v220 = vshrl.u32 %v219, 7
  %v221 = vsub.s32 1, %v220
  %v222 = vrot.slane %v199, %v221
  %224 = vbcast.lane.b32.xlu0 %v222, 256
  %v225 = vpop.permute.xlu0 %224
  %s227 = sor.u32 256, 8
  %228 = vbcast.lane.b32.xlu0 %v222, %s227
  %v229 = vpop.permute.xlu0 %228
  %s231 = sor.u32 256, 16
  %232 = vbcast.lane.b32.xlu0 %v222, %s231
  %v233 = vpop.permute.xlu0 %232
  %s235 = sor.u32 256, 24
  %236 = vbcast.lane.b32.xlu0 %v222, %s235
  %v237 = vpop.permute.xlu0 %236
  %v238 = vmul.f32 %v14, %v206
  %v239 = vmul.f32 %v15, %v206
  %v240 = vmul.f32 %v16, %v210
  %v241 = vmul.f32 %v17, %v210
  %v242 = vmul.f32 %v18, %v214
  %v243 = vmul.f32 %v19, %v214
  %v244 = vmul.f32 %v20, %v218
  %v245 = vmul.f32 %v21, %v218
  %v246 = vmul.f32 %v22, %v225
  %v247 = vmul.f32 %v23, %v225
  %v248 = vmul.f32 %v24, %v229
  %v249 = vmul.f32 %v25, %v229
  %v250 = vmul.f32 %v26, %v233
  %v251 = vmul.f32 %v27, %v233
  %v252 = vmul.f32 %v28, %v237
  %v253 = vmul.f32 %v29, %v237
  %254 = vst [vmem:[%s3] sm:$0xff] %v238
  %255 = vst [vmem:[%s3 + $0x8] sm:$0xff] %v239
  %256 = vst [vmem:[%s3 + $0x10] sm:$0xff] %v240
  %257 = vst [vmem:[%s3 + $0x18] sm:$0xff] %v241
  %258 = vst [vmem:[%s3 + $0x20] sm:$0xff] %v242
  %259 = vst [vmem:[%s3 + $0x28] sm:$0xff] %v243
  %260 = vst [vmem:[%s3 + $0x30] sm:$0xff] %v244
  %261 = vst [vmem:[%s3 + $0x38] sm:$0xff] %v245
  %262 = vst [vmem:[%s3 + $0x40] sm:$0xff] %v246
  %263 = vst [vmem:[%s3 + $0x48] sm:$0xff] %v247
  %264 = vst [vmem:[%s3 + $0x50] sm:$0xff] %v248
  %265 = vst [vmem:[%s3 + $0x58] sm:$0xff] %v249
  %266 = vst [vmem:[%s3 + $0x60] sm:$0xff] %v250
  %267 = vst [vmem:[%s3 + $0x68] sm:$0xff] %v251
  %268 = vst [vmem:[%s3 + $0x70] sm:$0xff] %v252
  %269 = vst [vmem:[%s3 + $0x78] sm:$0xff] %v253
  // Predicated region
  $region14: #{channel_attention.1} parent=0 // pred_check
    _
  $region15: #{channel_attention.1} parent=0 // pred_check_branch
    %271 = sbr.rel (0) target = $region17
  $region16: #{channel_attention.1} parent=0 // pred_region
    _
  $region17: #{channel_attention.1} parent=0 // pred_fallthru
    _
  // Predicated region
  $region18: #{channel_attention.1} parent=0 // pred_check
    _
  $region19: #{channel_attention.1} parent=0 // pred_check_branch
    %273 = sbr.rel (0) target = $region21
  $region20: #{channel_attention.1} parent=0 // pred_region
    _
  $region21: #{channel_attention.1} parent=0 // pred_fallthru
    _

</llo_original>
